<compile_context>
chip_gen: v7x
topology: tpu7x:2x2x1
jax: 0.10.0
libtpu: 0.0.40
codegen_flags: <defaults>
</compile_context>

<pallas_src>
import functools

import jax
import jax.numpy as jnp
from jax.experimental import pallas as pl
from jax.experimental.pallas import tpu as pltpu


def _full_spec(shape):
    # Whole-array block, single grid step.
    return pl.BlockSpec(shape, lambda i: (0,) * len(shape))


# ---------------------------------------------------------------------------
# Fused kernel: encoder -> VQ -> decoder -> losses
# ---------------------------------------------------------------------------
def vqvae_fused_kernel(*refs, n_enc, n_dec, commitment_cost):
    """Ref layout (inputs, then outputs):
      x,
      (enc_w, enc_b) * (n_enc + 1),      # BatchNorm already folded into w/b
      embedding, emb_sq,                 # codebook (K, D) and its (1, K) ||e||^2
      (dec_w, dec_b) * (n_dec + 1),
      recon_out, quant_out, idx_out, scal_out
    """
    it = iter(refs)
    x_ref = next(it)
    enc = [(next(it), next(it)) for _ in range(n_enc + 1)]
    emb_ref = next(it)
    esq_ref = next(it)
    dec = [(next(it), next(it)) for _ in range(n_dec + 1)]
    recon_ref = next(it)
    q_ref = next(it)
    idx_ref = next(it)
    scal_ref = next(it)

    x = x_ref[...]                                   # (B, input_dim)
    B = x.shape[0]

    # ---- encoder: Linear(+folded BN) + LeakyReLU(0.2); Dropout = identity ----
    h = x
    for li, (w_ref, b_ref) in enumerate(enc):
        h = jnp.dot(h, w_ref[...], preferred_element_type=jnp.float32) + b_ref[...]
        if li < n_enc:                               # no activation on the output layer
            h = jnp.where(h >= 0.0, h, 0.2 * h)
    z = h                                            # (B, D)
    D = z.shape[1]

    # ---- vector quantizer ----
    e = emb_ref[...]                                 # (K, D)
    K = e.shape[0]
    # ||z||^2 + ||e||^2 - 2 * z @ e^T  (contraction via dot_general, no explicit e.T)
    cross = jax.lax.dot_general(z, e, (((1,), (1,)), ((), ())),
                                preferred_element_type=jnp.float32)      # (B, K)
    dist = jnp.sum(z * z, axis=1, keepdims=True) + esq_ref[...] - 2.0 * cross

    # argmin along the codebook axis (first occurrence wins on ties)
    min_d = jnp.min(dist, axis=1, keepdims=True)
    lane_k = jax.lax.broadcasted_iota(jnp.int32, (B, K), 1)
    idx = jnp.min(jnp.where(dist <= min_d, lane_k, K), axis=1, keepdims=True)  # (B, 1)

    # codebook lookup via one-hot matmul (MXU friendly, no VMEM gather)
    one_hot = (lane_k == idx).astype(jnp.float32)                               # (B, K)
    q = jnp.dot(one_hot, e, preferred_element_type=jnp.float32)                 # (B, D)

    q_ref[...] = q
    idx_ref[...] = jnp.broadcast_to(idx, idx_ref.shape)     # lane-dense (B, 128)

    # vq loss = q_latent_loss + commitment_cost * e_latent_loss = (1+c)*MSE(q, z)
    diff = q - z
    vq_loss = (1.0 + commitment_cost) * jnp.sum(diff * diff, axis=(0, 1),
                                                keepdims=True) / (B * D)

    # perplexity
    avg = jnp.sum(one_hot, axis=0, keepdims=True) * (1.0 / B)                   # (1, K)
    ent = jnp.sum(avg * jnp.log(avg + 1e-10), axis=1, keepdims=True)
    perp = jnp.exp(-ent)                                                        # (1, 1)

    # ---- decoder ----
    h = q
    for li, (w_ref, b_ref) in enumerate(dec):
        h = jnp.dot(h, w_ref[...], preferred_element_type=jnp.float32) + b_ref[...]
        if li < n_dec:
            h = jnp.where(h >= 0.0, h, 0.2 * h)
    recon = h
    recon_ref[...] = recon

    # reconstruction MSE fused here (recon is already in vregs)
    rdiff = recon - x
    recon_loss = jnp.sum(rdiff * rdiff, axis=(0, 1), keepdims=True) / rdiff.size
    total = recon_loss + vq_loss

    # pack scalars into one lane-dense (1, 128) row:
    #   lane 0: vq_loss, lane 1: recon_loss, lane 2: perplexity, lane 3: total loss
    lane = jax.lax.broadcasted_iota(jnp.int32, scal_ref.shape, 1)
    scal = jnp.where(lane == 0, vq_loss,
           jnp.where(lane == 1, recon_loss,
           jnp.where(lane == 2, perp,
           jnp.where(lane == 3, total, 0.0))))
    scal_ref[...] = scal


# ---------------------------------------------------------------------------
# Wrapper: single pallas_call over the fully fused forward
# ---------------------------------------------------------------------------
def vqvae_forward(params, x, commitment_cost=0.25):
    B, input_dim = x.shape
    enc = params["encoder"]            # list of (w, b), BN already folded
    dec = params["decoder"]
    emb = params["embedding"]          # (K, D)
    esq = params["emb_sq"]             # (1, K), precomputed ||e||^2
    K, D = emb.shape
    n_enc = len(enc) - 1
    n_dec = len(dec) - 1

    inputs = [x]
    in_specs = [_full_spec(x.shape)]
    for w, b in enc:
        inputs += [w, b]
        in_specs += [_full_spec(w.shape), _full_spec(b.shape)]
    inputs += [emb, esq]
    in_specs += [_full_spec(emb.shape), _full_spec(esq.shape)]
    for w, b in dec:
        inputs += [w, b]
        in_specs += [_full_spec(w.shape), _full_spec(b.shape)]

    out_shape = (
        jax.ShapeDtypeStruct((B, input_dim), jnp.float32),   # reconstructions
        jax.ShapeDtypeStruct((B, D), jnp.float32),           # quantized
        jax.ShapeDtypeStruct((B, 128), jnp.int32),           # indices (lane-dense)
        jax.ShapeDtypeStruct((1, 128), jnp.float32),         # packed scalars
    )
    out_specs = (
        _full_spec((B, input_dim)),
        _full_spec((B, D)),
        _full_spec((B, 128)),
        _full_spec((1, 128)),
    )

    recon, quantized, idx, scal = pl.pallas_call(
        functools.partial(vqvae_fused_kernel, n_enc=n_enc, n_dec=n_dec,
                          commitment_cost=commitment_cost),
        out_shape=out_shape,
        grid=(1,),
        in_specs=in_specs,
        out_specs=out_specs,
        compiler_params=pltpu.CompilerParams(
            dimension_semantics=("arbitrary",)),
    )(*inputs)

    return {
        "reconstructions": recon,
        "quantized": quantized,
        "vq_loss": scal[0, 0],
        "reconstruction_loss": scal[0, 1],
        "loss": scal[0, 3],
        "perplexity": scal[0, 2],
        "encodings": idx[:, 0],
    }


# ---------------------------------------------------------------------------
# Parameter init (deterministic, PyTorch-like uniform(-1/sqrt(fan_in), ...)),
# with fresh-BatchNorm folding and precomputed codebook norms.
# ---------------------------------------------------------------------------
def init_linear(key, din, dout):
    kw, kb = jax.random.split(key)
    bound = 1.0 / jnp.sqrt(jnp.float32(din))
    w = jax.random.uniform(kw, (din, dout), jnp.float32, -bound, bound)
    b = jax.random.uniform(kb, (1, dout), jnp.float32, -bound, bound)
    return w, b


def fold_batchnorm(w, b, gamma, beta, mean, var, eps=1e-5):
    """Fold an inference-mode BatchNorm1d into the preceding Linear."""
    scale = gamma / jnp.sqrt(var + eps)                           # (dout,)
    w_f = w * scale[None, :]
    b_f = (b - mean[None, :]) * scale[None, :] + beta[None, :]
    return w_f, b_f


def init_vqvae_params(key, input_dim, hidden_dims, latent_dim, num_embeddings):
    keys = jax.random.split(key, 2 * (len(hidden_dims) + 1) + 1)
    ki = iter(keys)

    def fresh_bn(dout):
        # gamma=1, beta=0, running_mean=0, running_var=1 (fresh BatchNorm1d)
        return (jnp.ones((dout,), jnp.float32), jnp.zeros((dout,), jnp.float32),
                jnp.zeros((dout,), jnp.float32), jnp.ones((dout,), jnp.float32))

    encoder = []
    din = input_dim
    for h in hidden_dims:
        w, b = init_linear(next(ki), din, h)
        encoder.append(fold_batchnorm(w, b, *fresh_bn(h)))
        din = h
    encoder.append(init_linear(next(ki), din, latent_dim))         # output layer, no BN

    decoder = []
    din = latent_dim
    for h in hidden_dims[::-1]:
        w, b = init_linear(next(ki), din, h)
        decoder.append(fold_batchnorm(w, b, *fresh_bn(h)))
        din = h
    decoder.append(init_linear(next(ki), din, input_dim))          # output layer, no BN

    embedding = jax.random.uniform(
        next(ki), (num_embeddings, latent_dim), jnp.float32,
        -1.0 / num_embeddings, 1.0 / num_embeddings)
    emb_sq = jnp.sum(embedding * embedding, axis=1, keepdims=True).T   # (1, K)

    return {"encoder": encoder, "decoder": decoder,
            "embedding": embedding, "emb_sq": emb_sq}


if __name__ == "__main__":
    # small shapes consistent with the tabular VQ-VAE forward: x is [B, input_dim]
    B, INPUT_DIM = 8, 16
    HIDDEN_DIMS = [64, 32]
    LATENT_DIM = EMBEDDING_DIM = 32
    NUM_EMBEDDINGS = 128

    key = jax.random.PRNGKey(0)
    kx, kp = jax.random.split(key)
    x = jax.random.normal(kx, (B, INPUT_DIM), jnp.float32)
    params = init_vqvae_params(kp, INPUT_DIM, HIDDEN_DIMS, LATENT_DIM, NUM_EMBEDDINGS)

    results = jax.jit(vqvae_forward)(params, x)
    jax.block_until_ready(results)

    assert results["reconstructions"].shape == (B, INPUT_DIM)
    assert results["quantized"].shape == (B, EMBEDDING_DIM)
    assert results["encodings"].shape == (B,)
    assert bool(jnp.isfinite(results["loss"]))
    assert bool(jnp.isfinite(results["perplexity"]))
    assert bool(jnp.all((results["encodings"] >= 0)
                        & (results["encodings"] < NUM_EMBEDDINGS)))
    print("KERNEL_OK")
</pallas_src>

<mosaic_0001>
module attributes {stable_mosaic.version = 11 : i64} {
  func.func @vqvae_fused_kernel(%arg0: i32, %arg1: memref<8x16xf32, #tpu.memory_space<vmem>>, %arg2: memref<16x64xf32, #tpu.memory_space<vmem>>, %arg3: memref<1x64xf32, #tpu.memory_space<vmem>>, %arg4: memref<64x32xf32, #tpu.memory_space<vmem>>, %arg5: memref<1x32xf32, #tpu.memory_space<vmem>>, %arg6: memref<32x32xf32, #tpu.memory_space<vmem>>, %arg7: memref<1x32xf32, #tpu.memory_space<vmem>>, %arg8: memref<128x32xf32, #tpu.memory_space<vmem>>, %arg9: memref<1x128xf32, #tpu.memory_space<vmem>>, %arg10: memref<32x32xf32, #tpu.memory_space<vmem>>, %arg11: memref<1x32xf32, #tpu.memory_space<vmem>>, %arg12: memref<32x64xf32, #tpu.memory_space<vmem>>, %arg13: memref<1x64xf32, #tpu.memory_space<vmem>>, %arg14: memref<64x16xf32, #tpu.memory_space<vmem>>, %arg15: memref<1x16xf32, #tpu.memory_space<vmem>>, %arg16: memref<8x16xf32, #tpu.memory_space<vmem>>, %arg17: memref<8x32xf32, #tpu.memory_space<vmem>>, %arg18: memref<8x128xi32, #tpu.memory_space<vmem>>, %arg19: memref<1x128xf32, #tpu.memory_space<vmem>>) attributes {dimension_semantics = [#tpu.dimension_semantics<arbitrary>], iteration_bounds = array<i64: 1>, scalar_prefetch = 0 : i64, scratch_operands = 0 : i64, tpu.core_type = #tpu.core_type<tc>, window_params = [{pipeline_mode = #tpu.pipeline_mode<synchronous>, transform_indices = @transform_0, window_bounds = array<i64: 8, 16>}, {pipeline_mode = #tpu.pipeline_mode<synchronous>, transform_indices = @transform_1, window_bounds = array<i64: 16, 64>}, {pipeline_mode = #tpu.pipeline_mode<synchronous>, transform_indices = @transform_2, window_bounds = array<i64: 1, 64>}, {pipeline_mode = #tpu.pipeline_mode<synchronous>, transform_indices = @transform_3, window_bounds = array<i64: 64, 32>}, {pipeline_mode = #tpu.pipeline_mode<synchronous>, transform_indices = @transform_4, window_bounds = array<i64: 1, 32>}, {pipeline_mode = #tpu.pipeline_mode<synchronous>, transform_indices = @transform_5, window_bounds = array<i64: 32, 32>}, {pipeline_mode = #tpu.pipeline_mode<synchronous>, transform_indices = @transform_6, window_bounds = array<i64: 1, 32>}, {pipeline_mode = #tpu.pipeline_mode<synchronous>, transform_indices = @transform_7, window_bounds = array<i64: 128, 32>}, {pipeline_mode = #tpu.pipeline_mode<synchronous>, transform_indices = @transform_8, window_bounds = array<i64: 1, 128>}, {pipeline_mode = #tpu.pipeline_mode<synchronous>, transform_indices = @transform_9, window_bounds = array<i64: 32, 32>}, {pipeline_mode = #tpu.pipeline_mode<synchronous>, transform_indices = @transform_10, window_bounds = array<i64: 1, 32>}, {pipeline_mode = #tpu.pipeline_mode<synchronous>, transform_indices = @transform_11, window_bounds = array<i64: 32, 64>}, {pipeline_mode = #tpu.pipeline_mode<synchronous>, transform_indices = @transform_12, window_bounds = array<i64: 1, 64>}, {pipeline_mode = #tpu.pipeline_mode<synchronous>, transform_indices = @transform_13, window_bounds = array<i64: 64, 16>}, {pipeline_mode = #tpu.pipeline_mode<synchronous>, transform_indices = @transform_14, window_bounds = array<i64: 1, 16>}, {pipeline_mode = #tpu.pipeline_mode<synchronous>, transform_indices = @transform_15, window_bounds = array<i64: 8, 16>}, {pipeline_mode = #tpu.pipeline_mode<synchronous>, transform_indices = @transform_16, window_bounds = array<i64: 8, 32>}, {pipeline_mode = #tpu.pipeline_mode<synchronous>, transform_indices = @transform_17, window_bounds = array<i64: 8, 128>}, {pipeline_mode = #tpu.pipeline_mode<synchronous>, transform_indices = @transform_18, window_bounds = array<i64: 1, 128>}]} {
    %c0 = arith.constant 0 : index
    %c0_0 = arith.constant 0 : index
    %0 = vector.load %arg1[%c0, %c0_0] : memref<8x16xf32, #tpu.memory_space<vmem>>, vector<8x16xf32>
    %c0_1 = arith.constant 0 : index
    %c0_2 = arith.constant 0 : index
    %1 = vector.load %arg2[%c0_1, %c0_2] : memref<16x64xf32, #tpu.memory_space<vmem>>, vector<16x64xf32>
    %cst = arith.constant dense<0.000000e+00> : vector<8x64xf32>
    %2 = tpu.matmul %0, %1, %cst {dimension_numbers = #tpu.dot_dimension_numbers<[1], [0], [0], [1], [0, 0, 1, 1], [], []>} : vector<8x16xf32>, vector<16x64xf32>, vector<8x64xf32> -> vector<8x64xf32>
    %c0_3 = arith.constant 0 : index
    %c0_4 = arith.constant 0 : index
    %3 = vector.load %arg3[%c0_3, %c0_4] : memref<1x64xf32, #tpu.memory_space<vmem>>, vector<1x64xf32>
    %4 = vector.broadcast %3 : vector<1x64xf32> to vector<8x64xf32>
    %5 = arith.addf %2, %4 : vector<8x64xf32>
    %cst_5 = arith.constant 0.000000e+00 : f32
    %6 = vector.broadcast %cst_5 : f32 to vector<8x64xf32>
    %7 = arith.cmpf oge, %5, %6 : vector<8x64xf32>
    %cst_6 = arith.constant 2.000000e-01 : f32
    %8 = vector.broadcast %cst_6 : f32 to vector<8x64xf32>
    %9 = arith.mulf %8, %5 : vector<8x64xf32>
    %10 = arith.select %7, %5, %9 : vector<8x64xi1>, vector<8x64xf32>
    %c0_7 = arith.constant 0 : index
    %c0_8 = arith.constant 0 : index
    %11 = vector.load %arg4[%c0_7, %c0_8] : memref<64x32xf32, #tpu.memory_space<vmem>>, vector<64x32xf32>
    %cst_9 = arith.constant dense<0.000000e+00> : vector<8x32xf32>
    %12 = tpu.matmul %10, %11, %cst_9 {dimension_numbers = #tpu.dot_dimension_numbers<[1], [0], [0], [1], [0, 0, 1, 1], [], []>} : vector<8x64xf32>, vector<64x32xf32>, vector<8x32xf32> -> vector<8x32xf32>
    %c0_10 = arith.constant 0 : index
    %c0_11 = arith.constant 0 : index
    %13 = vector.load %arg5[%c0_10, %c0_11] : memref<1x32xf32, #tpu.memory_space<vmem>>, vector<1x32xf32>
    %14 = vector.broadcast %13 : vector<1x32xf32> to vector<8x32xf32>
    %15 = arith.addf %12, %14 : vector<8x32xf32>
    %cst_12 = arith.constant 0.000000e+00 : f32
    %16 = vector.broadcast %cst_12 : f32 to vector<8x32xf32>
    %17 = arith.cmpf oge, %15, %16 : vector<8x32xf32>
    %cst_13 = arith.constant 2.000000e-01 : f32
    %18 = vector.broadcast %cst_13 : f32 to vector<8x32xf32>
    %19 = arith.mulf %18, %15 : vector<8x32xf32>
    %20 = arith.select %17, %15, %19 : vector<8x32xi1>, vector<8x32xf32>
    %c0_14 = arith.constant 0 : index
    %c0_15 = arith.constant 0 : index
    %21 = vector.load %arg6[%c0_14, %c0_15] : memref<32x32xf32, #tpu.memory_space<vmem>>, vector<32x32xf32>
    %cst_16 = arith.constant dense<0.000000e+00> : vector<8x32xf32>
    %22 = tpu.matmul %20, %21, %cst_16 {dimension_numbers = #tpu.dot_dimension_numbers<[1], [0], [0], [1], [0, 0, 1, 1], [], []>} : vector<8x32xf32>, vector<32x32xf32>, vector<8x32xf32> -> vector<8x32xf32>
    %c0_17 = arith.constant 0 : index
    %c0_18 = arith.constant 0 : index
    %23 = vector.load %arg7[%c0_17, %c0_18] : memref<1x32xf32, #tpu.memory_space<vmem>>, vector<1x32xf32>
    %24 = vector.broadcast %23 : vector<1x32xf32> to vector<8x32xf32>
    %25 = arith.addf %22, %24 : vector<8x32xf32>
    %c0_19 = arith.constant 0 : index
    %c0_20 = arith.constant 0 : index
    %26 = vector.load %arg8[%c0_19, %c0_20] : memref<128x32xf32, #tpu.memory_space<vmem>>, vector<128x32xf32>
    %cst_21 = arith.constant dense<0.000000e+00> : vector<8x128xf32>
    %27 = tpu.matmul %25, %26, %cst_21 {dimension_numbers = #tpu.dot_dimension_numbers<[1], [1], [0], [0], [0, 0, 1, 0], [], []>} : vector<8x32xf32>, vector<128x32xf32>, vector<8x128xf32> -> vector<8x128xf32>
    %28 = arith.mulf %25, %25 : vector<8x32xf32>
    %cst_22 = arith.constant dense<0.000000e+00> : vector<8xf32>
    %29 = vector.multi_reduction <add>, %28, %cst_22 [1] : vector<8x32xf32> to vector<8xf32>
    %30 = vector.shape_cast %29 : vector<8xf32> to vector<8x1xf32>
    %c0_23 = arith.constant 0 : index
    %c0_24 = arith.constant 0 : index
    %31 = vector.load %arg9[%c0_23, %c0_24] : memref<1x128xf32, #tpu.memory_space<vmem>>, vector<1x128xf32>
    %32 = vector.broadcast %30 : vector<8x1xf32> to vector<8x128xf32>
    %33 = vector.broadcast %31 : vector<1x128xf32> to vector<8x128xf32>
    %34 = arith.addf %32, %33 : vector<8x128xf32>
    %cst_25 = arith.constant 2.000000e+00 : f32
    %35 = vector.broadcast %cst_25 : f32 to vector<8x128xf32>
    %36 = arith.mulf %35, %27 : vector<8x128xf32>
    %37 = arith.subf %34, %36 : vector<8x128xf32>
    %cst_26 = arith.constant dense<0x7F800000> : vector<8xf32>
    %38 = vector.multi_reduction <minimumf>, %37, %cst_26 [1] : vector<8x128xf32> to vector<8xf32>
    %39 = vector.shape_cast %38 : vector<8xf32> to vector<8x1xf32>
    %40 = tpu.iota {dimensions = array<i32: 1>} : vector<8x128xi32>
    %41 = vector.broadcast %39 : vector<8x1xf32> to vector<8x128xf32>
    %42 = arith.cmpf ole, %37, %41 : vector<8x128xf32>
    %c128_i32 = arith.constant 128 : i32
    %43 = vector.broadcast %c128_i32 : i32 to vector<8x128xi32>
    %44 = arith.select %42, %40, %43 : vector<8x128xi1>, vector<8x128xi32>
    %cst_27 = arith.constant dense<2147483647> : vector<8xi32>
    %45 = vector.multi_reduction <minsi>, %44, %cst_27 [1] : vector<8x128xi32> to vector<8xi32>
    %46 = vector.shape_cast %45 : vector<8xi32> to vector<8x1xi32>
    %47 = vector.broadcast %46 : vector<8x1xi32> to vector<8x128xi32>
    %48 = arith.cmpi eq, %40, %47 : vector<8x128xi32>
    %49 = arith.extui %48 : vector<8x128xi1> to vector<8x128xi32>
    %50 = arith.sitofp %49 : vector<8x128xi32> to vector<8x128xf32>
    %cst_28 = arith.constant dense<0.000000e+00> : vector<8x32xf32>
    %51 = tpu.matmul %50, %26, %cst_28 {dimension_numbers = #tpu.dot_dimension_numbers<[1], [0], [0], [1], [0, 0, 1, 1], [], []>} : vector<8x128xf32>, vector<128x32xf32>, vector<8x32xf32> -> vector<8x32xf32>
    %c0_29 = arith.constant 0 : index
    %c0_30 = arith.constant 0 : index
    %52 = vector.load %arg17[%c0_29, %c0_30] : memref<8x32xf32, #tpu.memory_space<vmem>>, vector<8x32xf32>
    tpu.vector_store %arg17[%c0_29, %c0_30], %51 {strides = array<i32>} : memref<8x32xf32, #tpu.memory_space<vmem>>, vector<8x32xf32>,
    %53 = vector.shape_cast %46 : vector<8x1xi32> to vector<8x1xi32>
    %54 = vector.broadcast %53 : vector<8x1xi32> to vector<8x128xi32>
    %c0_31 = arith.constant 0 : index
    %c0_32 = arith.constant 0 : index
    %55 = vector.load %arg18[%c0_31, %c0_32] : memref<8x128xi32, #tpu.memory_space<vmem>>, vector<8x128xi32>
    tpu.vector_store %arg18[%c0_31, %c0_32], %54 {strides = array<i32>} : memref<8x128xi32, #tpu.memory_space<vmem>>, vector<8x128xi32>,
    %56 = arith.subf %51, %25 : vector<8x32xf32>
    %57 = arith.mulf %56, %56 : vector<8x32xf32>
    %58 = vector.shape_cast %57 : vector<8x32xf32> to vector<1x8x32xf32>
    %cst_33 = arith.constant dense<0.000000e+00> : vector<1xf32>
    %59 = vector.multi_reduction <add>, %58, %cst_33 [1, 2] : vector<1x8x32xf32> to vector<1xf32>
    %60 = vector.shape_cast %59 : vector<1xf32> to vector<1x1x1xf32>
    %61 = vector.extract %60[0, 0, 0] : f32 from vector<1x1x1xf32>
    %62 = vector.broadcast %61 : f32 to vector<1x1xf32>
    %cst_34 = arith.constant 1.250000e+00 : f32
    %63 = vector.broadcast %cst_34 : f32 to vector<1x1xf32>
    %64 = arith.mulf %63, %62 : vector<1x1xf32>
    %cst_35 = arith.constant 2.560000e+02 : f32
    %65 = vector.broadcast %cst_35 : f32 to vector<1x1xf32>
    %66 = arith.divf %64, %65 : vector<1x1xf32>
    %cst_36 = arith.constant dense<0.000000e+00> : vector<128xf32>
    %67 = vector.multi_reduction <add>, %50, %cst_36 [0] : vector<8x128xf32> to vector<128xf32>
    %68 = vector.shape_cast %67 : vector<128xf32> to vector<1x128xf32>
    %cst_37 = arith.constant 1.250000e-01 : f32
    %69 = vector.broadcast %cst_37 : f32 to vector<1x128xf32>
    %70 = arith.mulf %68, %69 : vector<1x128xf32>
    %cst_38 = arith.constant 1.000000e-10 : f32
    %71 = vector.broadcast %cst_38 : f32 to vector<1x128xf32>
    %72 = arith.addf %70, %71 : vector<1x128xf32>
    %73 = math.log %72 : vector<1x128xf32>
    %74 = arith.mulf %70, %73 : vector<1x128xf32>
    %cst_39 = arith.constant dense<0.000000e+00> : vector<1xf32>
    %75 = vector.multi_reduction <add>, %74, %cst_39 [1] : vector<1x128xf32> to vector<1xf32>
    %76 = vector.shape_cast %75 : vector<1xf32> to vector<1x1xf32>
    %cst_40 = arith.constant 0.000000e+00 : f32
    %77 = vector.broadcast %cst_40 : f32 to vector<1x1xf32>
    %78 = arith.subf %77, %76 : vector<1x1xf32>
    %79 = math.exp %78 : vector<1x1xf32>
    %c0_41 = arith.constant 0 : index
    %c0_42 = arith.constant 0 : index
    %80 = vector.load %arg10[%c0_41, %c0_42] : memref<32x32xf32, #tpu.memory_space<vmem>>, vector<32x32xf32>
    %cst_43 = arith.constant dense<0.000000e+00> : vector<8x32xf32>
    %81 = tpu.matmul %51, %80, %cst_43 {dimension_numbers = #tpu.dot_dimension_numbers<[1], [0], [0], [1], [0, 0, 1, 1], [], []>} : vector<8x32xf32>, vector<32x32xf32>, vector<8x32xf32> -> vector<8x32xf32>
    %c0_44 = arith.constant 0 : index
    %c0_45 = arith.constant 0 : index
    %82 = vector.load %arg11[%c0_44, %c0_45] : memref<1x32xf32, #tpu.memory_space<vmem>>, vector<1x32xf32>
    %83 = vector.broadcast %82 : vector<1x32xf32> to vector<8x32xf32>
    %84 = arith.addf %81, %83 : vector<8x32xf32>
    %cst_46 = arith.constant 0.000000e+00 : f32
    %85 = vector.broadcast %cst_46 : f32 to vector<8x32xf32>
    %86 = arith.cmpf oge, %84, %85 : vector<8x32xf32>
    %cst_47 = arith.constant 2.000000e-01 : f32
    %87 = vector.broadcast %cst_47 : f32 to vector<8x32xf32>
    %88 = arith.mulf %87, %84 : vector<8x32xf32>
    %89 = arith.select %86, %84, %88 : vector<8x32xi1>, vector<8x32xf32>
    %c0_48 = arith.constant 0 : index
    %c0_49 = arith.constant 0 : index
    %90 = vector.load %arg12[%c0_48, %c0_49] : memref<32x64xf32, #tpu.memory_space<vmem>>, vector<32x64xf32>
    %cst_50 = arith.constant dense<0.000000e+00> : vector<8x64xf32>
    %91 = tpu.matmul %89, %90, %cst_50 {dimension_numbers = #tpu.dot_dimension_numbers<[1], [0], [0], [1], [0, 0, 1, 1], [], []>} : vector<8x32xf32>, vector<32x64xf32>, vector<8x64xf32> -> vector<8x64xf32>
    %c0_51 = arith.constant 0 : index
    %c0_52 = arith.constant 0 : index
    %92 = vector.load %arg13[%c0_51, %c0_52] : memref<1x64xf32, #tpu.memory_space<vmem>>, vector<1x64xf32>
    %93 = vector.broadcast %92 : vector<1x64xf32> to vector<8x64xf32>
    %94 = arith.addf %91, %93 : vector<8x64xf32>
    %cst_53 = arith.constant 0.000000e+00 : f32
    %95 = vector.broadcast %cst_53 : f32 to vector<8x64xf32>
    %96 = arith.cmpf oge, %94, %95 : vector<8x64xf32>
    %cst_54 = arith.constant 2.000000e-01 : f32
    %97 = vector.broadcast %cst_54 : f32 to vector<8x64xf32>
    %98 = arith.mulf %97, %94 : vector<8x64xf32>
    %99 = arith.select %96, %94, %98 : vector<8x64xi1>, vector<8x64xf32>
    %c0_55 = arith.constant 0 : index
    %c0_56 = arith.constant 0 : index
    %100 = vector.load %arg14[%c0_55, %c0_56] : memref<64x16xf32, #tpu.memory_space<vmem>>, vector<64x16xf32>
    %cst_57 = arith.constant dense<0.000000e+00> : vector<8x16xf32>
    %101 = tpu.matmul %99, %100, %cst_57 {dimension_numbers = #tpu.dot_dimension_numbers<[1], [0], [0], [1], [0, 0, 1, 1], [], []>} : vector<8x64xf32>, vector<64x16xf32>, vector<8x16xf32> -> vector<8x16xf32>
    %c0_58 = arith.constant 0 : index
    %c0_59 = arith.constant 0 : index
    %102 = vector.load %arg15[%c0_58, %c0_59] : memref<1x16xf32, #tpu.memory_space<vmem>>, vector<1x16xf32>
    %103 = vector.broadcast %102 : vector<1x16xf32> to vector<8x16xf32>
    %104 = arith.addf %101, %103 : vector<8x16xf32>
    %c0_60 = arith.constant 0 : index
    %c0_61 = arith.constant 0 : index
    %105 = vector.load %arg16[%c0_60, %c0_61] : memref<8x16xf32, #tpu.memory_space<vmem>>, vector<8x16xf32>
    tpu.vector_store %arg16[%c0_60, %c0_61], %104 {strides = array<i32>} : memref<8x16xf32, #tpu.memory_space<vmem>>, vector<8x16xf32>,
    %106 = arith.subf %104, %0 : vector<8x16xf32>
    %107 = arith.mulf %106, %106 : vector<8x16xf32>
    %108 = vector.shape_cast %107 : vector<8x16xf32> to vector<1x8x16xf32>
    %cst_62 = arith.constant dense<0.000000e+00> : vector<1xf32>
    %109 = vector.multi_reduction <add>, %108, %cst_62 [1, 2] : vector<1x8x16xf32> to vector<1xf32>
    %110 = vector.shape_cast %109 : vector<1xf32> to vector<1x1x1xf32>
    %111 = vector.extract %110[0, 0, 0] : f32 from vector<1x1x1xf32>
    %112 = vector.broadcast %111 : f32 to vector<1x1xf32>
    %cst_63 = arith.constant 1.280000e+02 : f32
    %113 = vector.broadcast %cst_63 : f32 to vector<1x1xf32>
    %114 = arith.divf %112, %113 : vector<1x1xf32>
    %115 = arith.addf %114, %66 : vector<1x1xf32>
    %116 = tpu.iota {dimensions = array<i32: 1>} : vector<1x128xi32>
    %c0_i32 = arith.constant 0 : i32
    %117 = vector.broadcast %c0_i32 : i32 to vector<1x128xi32>
    %118 = arith.cmpi eq, %116, %117 : vector<1x128xi32>
    %c1_i32 = arith.constant 1 : i32
    %119 = vector.broadcast %c1_i32 : i32 to vector<1x128xi32>
    %120 = arith.cmpi eq, %116, %119 : vector<1x128xi32>
    %c2_i32 = arith.constant 2 : i32
    %121 = vector.broadcast %c2_i32 : i32 to vector<1x128xi32>
    %122 = arith.cmpi eq, %116, %121 : vector<1x128xi32>
    %c3_i32 = arith.constant 3 : i32
    %123 = vector.broadcast %c3_i32 : i32 to vector<1x128xi32>
    %124 = arith.cmpi eq, %116, %123 : vector<1x128xi32>
    %cst_64 = arith.constant 0.000000e+00 : f32
    %125 = vector.shape_cast %115 : vector<1x1xf32> to vector<1x1xf32>
    %126 = vector.broadcast %125 : vector<1x1xf32> to vector<1x128xf32>
    %127 = vector.broadcast %cst_64 : f32 to vector<1x128xf32>
    %128 = arith.select %124, %126, %127 : vector<1x128xi1>, vector<1x128xf32>
    %129 = vector.shape_cast %79 : vector<1x1xf32> to vector<1x1xf32>
    %130 = vector.broadcast %129 : vector<1x1xf32> to vector<1x128xf32>
    %131 = arith.select %122, %130, %128 : vector<1x128xi1>, vector<1x128xf32>
    %132 = vector.shape_cast %114 : vector<1x1xf32> to vector<1x1xf32>
    %133 = vector.broadcast %132 : vector<1x1xf32> to vector<1x128xf32>
    %134 = arith.select %120, %133, %131 : vector<1x128xi1>, vector<1x128xf32>
    %135 = vector.shape_cast %66 : vector<1x1xf32> to vector<1x1xf32>
    %136 = vector.broadcast %135 : vector<1x1xf32> to vector<1x128xf32>
    %137 = arith.select %118, %136, %134 : vector<1x128xi1>, vector<1x128xf32>
    %c0_65 = arith.constant 0 : index
    %c0_66 = arith.constant 0 : index
    %138 = vector.load %arg19[%c0_65, %c0_66] : memref<1x128xf32, #tpu.memory_space<vmem>>, vector<1x128xf32>
    tpu.vector_store %arg19[%c0_65, %c0_66], %137 {strides = array<i32>} : memref<1x128xf32, #tpu.memory_space<vmem>>, vector<1x128xf32>,
    return
  }
  func.func @transform_0(%arg0: i32) -> (i32, i32) {
    %c0_i32 = arith.constant 0 : i32
    %c0_i32_0 = arith.constant 0 : i32
    %c0_i32_1 = arith.constant 0 : i32
    return %c0_i32, %c0_i32_0 : i32, i32
  }
  func.func @transform_1(%arg0: i32) -> (i32, i32) {
    %c0_i32 = arith.constant 0 : i32
    %c0_i32_0 = arith.constant 0 : i32
    %c0_i32_1 = arith.constant 0 : i32
    return %c0_i32, %c0_i32_0 : i32, i32
  }
  func.func @transform_2(%arg0: i32) -> (i32, i32) {
    %c0_i32 = arith.constant 0 : i32
    %c0_i32_0 = arith.constant 0 : i32
    %c0_i32_1 = arith.constant 0 : i32
    return %c0_i32, %c0_i32_0 : i32, i32
  }
  func.func @transform_3(%arg0: i32) -> (i32, i32) {
    %c0_i32 = arith.constant 0 : i32
    %c0_i32_0 = arith.constant 0 : i32
    %c0_i32_1 = arith.constant 0 : i32
    return %c0_i32, %c0_i32_0 : i32, i32
  }
  func.func @transform_4(%arg0: i32) -> (i32, i32) {
    %c0_i32 = arith.constant 0 : i32
    %c0_i32_0 = arith.constant 0 : i32
    %c0_i32_1 = arith.constant 0 : i32
    return %c0_i32, %c0_i32_0 : i32, i32
  }
  func.func @transform_5(%arg0: i32) -> (i32, i32) {
    %c0_i32 = arith.constant 0 : i32
    %c0_i32_0 = arith.constant 0 : i32
    %c0_i32_1 = arith.constant 0 : i32
    return %c0_i32, %c0_i32_0 : i32, i32
  }
  func.func @transform_6(%arg0: i32) -> (i32, i32) {
    %c0_i32 = arith.constant 0 : i32
    %c0_i32_0 = arith.constant 0 : i32
    %c0_i32_1 = arith.constant 0 : i32
    return %c0_i32, %c0_i32_0 : i32, i32
  }
  func.func @transform_7(%arg0: i32) -> (i32, i32) {
    %c0_i32 = arith.constant 0 : i32
    %c0_i32_0 = arith.constant 0 : i32
    %c0_i32_1 = arith.constant 0 : i32
    return %c0_i32, %c0_i32_0 : i32, i32
  }
  func.func @transform_8(%arg0: i32) -> (i32, i32) {
    %c0_i32 = arith.constant 0 : i32
    %c0_i32_0 = arith.constant 0 : i32
    %c0_i32_1 = arith.constant 0 : i32
    return %c0_i32, %c0_i32_0 : i32, i32
  }
  func.func @transform_9(%arg0: i32) -> (i32, i32) {
    %c0_i32 = arith.constant 0 : i32
    %c0_i32_0 = arith.constant 0 : i32
    %c0_i32_1 = arith.constant 0 : i32
    return %c0_i32, %c0_i32_0 : i32, i32
  }
  func.func @transform_10(%arg0: i32) -> (i32, i32) {
    %c0_i32 = arith.constant 0 : i32
    %c0_i32_0 = arith.constant 0 : i32
    %c0_i32_1 = arith.constant 0 : i32
    return %c0_i32, %c0_i32_0 : i32, i32
  }
  func.func @transform_11(%arg0: i32) -> (i32, i32) {
    %c0_i32 = arith.constant 0 : i32
    %c0_i32_0 = arith.constant 0 : i32
    %c0_i32_1 = arith.constant 0 : i32
    return %c0_i32, %c0_i32_0 : i32, i32
  }
  func.func @transform_12(%arg0: i32) -> (i32, i32) {
    %c0_i32 = arith.constant 0 : i32
    %c0_i32_0 = arith.constant 0 : i32
    %c0_i32_1 = arith.constant 0 : i32
    return %c0_i32, %c0_i32_0 : i32, i32
  }
  func.func @transform_13(%arg0: i32) -> (i32, i32) {
    %c0_i32 = arith.constant 0 : i32
    %c0_i32_0 = arith.constant 0 : i32
    %c0_i32_1 = arith.constant 0 : i32
    return %c0_i32, %c0_i32_0 : i32, i32
  }
  func.func @transform_14(%arg0: i32) -> (i32, i32) {
    %c0_i32 = arith.constant 0 : i32
    %c0_i32_0 = arith.constant 0 : i32
    %c0_i32_1 = arith.constant 0 : i32
    return %c0_i32, %c0_i32_0 : i32, i32
  }
  func.func @transform_15(%arg0: i32) -> (i32, i32) {
    %c0_i32 = arith.constant 0 : i32
    %c0_i32_0 = arith.constant 0 : i32
    %c0_i32_1 = arith.constant 0 : i32
    return %c0_i32, %c0_i32_0 : i32, i32
  }
  func.func @transform_16(%arg0: i32) -> (i32, i32) {
    %c0_i32 = arith.constant 0 : i32
    %c0_i32_0 = arith.constant 0 : i32
    %c0_i32_1 = arith.constant 0 : i32
    return %c0_i32, %c0_i32_0 : i32, i32
  }
  func.func @transform_17(%arg0: i32) -> (i32, i32) {
    %c0_i32 = arith.constant 0 : i32
    %c0_i32_0 = arith.constant 0 : i32
    %c0_i32_1 = arith.constant 0 : i32
    return %c0_i32, %c0_i32_0 : i32, i32
  }
  func.func @transform_18(%arg0: i32) -> (i32, i32) {
    %c0_i32 = arith.constant 0 : i32
    %c0_i32_0 = arith.constant 0 : i32
    %c0_i32_1 = arith.constant 0 : i32
    return %c0_i32, %c0_i32_0 : i32, i32
  }
}

</mosaic_0001>

<llo_original>
// kernel: vqvae_forward.1
$region0: #{vqvae_forward.1}
  #allocation0 [shape = 'u32[]', space=smem, size = 0x4, offset = 0x4, fixed_abs, tag = 'smem constant byte address 0x4 - core index']
  #allocation1 [shape = 'u32[144,128]{1,0:T(1,128)}', space=vmem, size = 0x12000, scoped, tag = 'internal scratch']
  %s0 = inlined_call_operand.vmem [shape: f32[8,16], index: 0, kind: input, shape index: {}]
  %s1 = inlined_call_operand.vmem [shape: f32[16,64], index: 1, kind: input, shape index: {}]
  %s2 = inlined_call_operand.vmem [shape: f32[1,64], index: 2, kind: input, shape index: {}]
  %s3 = inlined_call_operand.vmem [shape: f32[64,32], index: 3, kind: input, shape index: {}]
  %s4 = inlined_call_operand.vmem [shape: f32[1,32], index: 4, kind: input, shape index: {}]
  %s5 = inlined_call_operand.vmem [shape: f32[32,32], index: 5, kind: input, shape index: {}]
  %s6 = inlined_call_operand.vmem [shape: f32[1,32], index: 6, kind: input, shape index: {}]
  %s7 = inlined_call_operand.vmem [shape: f32[128,32], index: 7, kind: input, shape index: {}]
  %s8 = inlined_call_operand.vmem [shape: f32[1,128], index: 8, kind: input, shape index: {}]
  %s9 = inlined_call_operand.vmem [shape: f32[32,32], index: 9, kind: input, shape index: {}]
  %s10 = inlined_call_operand.vmem [shape: f32[1,32], index: 10, kind: input, shape index: {}]
  %s11 = inlined_call_operand.vmem [shape: f32[32,64], index: 11, kind: input, shape index: {}]
  %s12 = inlined_call_operand.vmem [shape: f32[1,64], index: 12, kind: input, shape index: {}]
  %s13 = inlined_call_operand.vmem [shape: f32[64,16], index: 13, kind: input, shape index: {}]
  %s14 = inlined_call_operand.vmem [shape: f32[1,16], index: 14, kind: input, shape index: {}]
  %s15 = inlined_call_operand.hbm [shape: f32[8,16], index: 15, kind: output, shape index: {0}]
  %s16 = inlined_call_operand.hbm [shape: f32[8,32], index: 16, kind: output, shape index: {1}]
  %s17 = inlined_call_operand.vmem [shape: s32[8,128], index: 17, kind: output, shape index: {2}]
  %s18 = inlined_call_operand.vmem [shape: f32[1,128], index: 18, kind: output, shape index: {3}]
  %19 = xla_tuple %s15, %s16, %s17, %s18
  %s20 = sld [smem:[#allocation0]]
  $region94: #{vqvae_forward.1} parent=0
    _
  %s22 = ssub.s32 1, %s20
  %s23 = scalar_select 0, %s22, %s20
  $region1: #{vqvae_forward.1} parent=0
    #allocation2 [shape = 'u8[4096]{0}', space=vmem, size = 0x1000, scoped, tag = 'output window, operand 0, single buffered']
    #allocation3 [shape = 's32[1]{0}', space=sflag, size = 0x4, scoped, tag = 'scoped memory for vqvae_forward.1']
    #allocation4 [shape = 'u8[4096]{0}', space=vmem, size = 0x1000, scoped, tag = 'output window, operand 1, single buffered']
    #allocation5 [shape = 's32[1]{0}', space=sflag, size = 0x4, scoped, tag = 'scoped memory for vqvae_forward.1']
    %24 = vsyncpa [#allocation3], 0
    %25 = vsyncpa [#allocation5], 0
    // Predicated region
    $region2: #{vqvae_forward.1} parent=1 // pred_check
      _
    $region3: #{vqvae_forward.1} parent=1 // pred_check_branch
      %27 = sbr.rel (0) target = $region5
    $region4: #{vqvae_forward.1} parent=1 // pred_region
      _
    $region5: #{vqvae_forward.1} parent=1 // pred_fallthru
      _
    // Predicated region
    $region6: #{vqvae_forward.1} parent=1 // pred_check
      _
    $region7: #{vqvae_forward.1} parent=1 // pred_check_branch
      %29 = sbr.rel (0) target = $region9
    $region8: #{vqvae_forward.1} parent=1 // pred_region
      _
    $region9: #{vqvae_forward.1} parent=1 // pred_fallthru
      _
    // Predicated region
    $region10: #{vqvae_forward.1} parent=1 // pred_check
      _
    $region11: #{vqvae_forward.1} parent=1 // pred_check_branch
      %31 = sbr.rel (0) target = $region13
    $region12: #{vqvae_forward.1} parent=1 // pred_region
      _
    $region13: #{vqvae_forward.1} parent=1 // pred_fallthru
      _
    // Predicated region
    $region14: #{vqvae_forward.1} parent=1 // pred_check
      _
    $region15: #{vqvae_forward.1} parent=1 // pred_check_branch
      %33 = sbr.rel (0) target = $region17
    $region16: #{vqvae_forward.1} parent=1 // pred_region
      _
    $region17: #{vqvae_forward.1} parent=1 // pred_fallthru
      _
    // Predicated region
    $region18: #{vqvae_forward.1} parent=1 // pred_check
      _
    $region19: #{vqvae_forward.1} parent=1 // pred_check_branch
      %35 = sbr.rel (0) target = $region21
    $region20: #{vqvae_forward.1} parent=1 // pred_region
      _
    $region21: #{vqvae_forward.1} parent=1 // pred_fallthru
      _
    // Predicated region
    $region22: #{vqvae_forward.1} parent=1 // pred_check
      _
    $region23: #{vqvae_forward.1} parent=1 // pred_check_branch
      %37 = sbr.rel (0) target = $region25
    $region24: #{vqvae_forward.1} parent=1 // pred_region
      _
    $region25: #{vqvae_forward.1} parent=1 // pred_fallthru
      _
    // Predicated region
    $region26: #{vqvae_forward.1} parent=1 // pred_check
      _
    $region27: #{vqvae_forward.1} parent=1 // pred_check_branch
      %39 = sbr.rel (0) target = $region29
    $region28: #{vqvae_forward.1} parent=1 // pred_region
      _
    $region29: #{vqvae_forward.1} parent=1 // pred_fallthru
      _
    // Predicated region
    $region30: #{vqvae_forward.1} parent=1 // pred_check
      _
    $region31: #{vqvae_forward.1} parent=1 // pred_check_branch
      %41 = sbr.rel (0) target = $region33
    $region32: #{vqvae_forward.1} parent=1 // pred_region
      _
    $region33: #{vqvae_forward.1} parent=1 // pred_fallthru
      _
    // Predicated region
    $region34: #{vqvae_forward.1} parent=1 // pred_check
      _
    $region35: #{vqvae_forward.1} parent=1 // pred_check_branch
      %43 = sbr.rel (0) target = $region37
    $region36: #{vqvae_forward.1} parent=1 // pred_region
      _
    $region37: #{vqvae_forward.1} parent=1 // pred_fallthru
      _
    // Predicated region
    $region38: #{vqvae_forward.1} parent=1 // pred_check
      _
    $region39: #{vqvae_forward.1} parent=1 // pred_check_branch
      %45 = sbr.rel (0) target = $region41
    $region40: #{vqvae_forward.1} parent=1 // pred_region
      _
    $region41: #{vqvae_forward.1} parent=1 // pred_fallthru
      _
    // Predicated region
    $region42: #{vqvae_forward.1} parent=1 // pred_check
      _
    $region43: #{vqvae_forward.1} parent=1 // pred_check_branch
      %47 = sbr.rel (0) target = $region45
    $region44: #{vqvae_forward.1} parent=1 // pred_region
      _
    $region45: #{vqvae_forward.1} parent=1 // pred_fallthru
      _
    // Predicated region
    $region46: #{vqvae_forward.1} parent=1 // pred_check
      _
    $region47: #{vqvae_forward.1} parent=1 // pred_check_branch
      %49 = sbr.rel (0) target = $region49
    $region48: #{vqvae_forward.1} parent=1 // pred_region
      _
    $region49: #{vqvae_forward.1} parent=1 // pred_fallthru
      _
    // Predicated region
    $region50: #{vqvae_forward.1} parent=1 // pred_check
      _
    $region51: #{vqvae_forward.1} parent=1 // pred_check_branch
      %51 = sbr.rel (0) target = $region53
    $region52: #{vqvae_forward.1} parent=1 // pred_region
      _
    $region53: #{vqvae_forward.1} parent=1 // pred_fallthru
      _
    // Predicated region
    $region54: #{vqvae_forward.1} parent=1 // pred_check
      _
    $region55: #{vqvae_forward.1} parent=1 // pred_check_branch
      %53 = sbr.rel (0) target = $region57
    $region56: #{vqvae_forward.1} parent=1 // pred_region
      _
    $region57: #{vqvae_forward.1} parent=1 // pred_fallthru
      _
    // Predicated region
    $region58: #{vqvae_forward.1} parent=1 // pred_check
      _
    $region59: #{vqvae_forward.1} parent=1 // pred_check_branch
      %55 = sbr.rel (0) target = $region61
    $region60: #{vqvae_forward.1} parent=1 // pred_region
      _
    $region61: #{vqvae_forward.1} parent=1 // pred_fallthru
      _
    %v56 = vld [vmem:[%s0] sm:$0xff]
    %v57 = vld [vmem:[%s1] sm:$0xff]
    %v58 = vld [vmem:[%s1 + $0x8] sm:$0xff]
    %v59 = vld [vmem:[%s2] sm:$0x1]
    %v61 = vlaneseq
    %v62 = vshrl.u32 %v61, 7
    %v63 = vsub.s32 0, %v62
    %v64 = vrot.slane %v59, %v63
    %vm66 = vcmask 130048
    %v68 = vsel %vm66, %v56, 0
    %70 = vmatprep.subr.mxu0 0.0
    %71 = vmatpush1.msra.mxu0 %v57
    %72 = vmatprep.subr.mxu0 0.0
    %73 = vmatpush1.msra.mxu0 %v58
    %74 = vmatprep.subr.mxu0 0.0
    %75 = vmatpush1.msra.mxu0 0.0
    %76 = vmatprep.subr.mxu0 0.0
    %77 = vmatpush1.msra.mxu0 0.0
    %78 = vmatprep.subr.mxu0 0.0
    %79 = vmatpush1.msra.mxu0 0.0
    %80 = vmatprep.subr.mxu0 0.0
    %81 = vmatpush1.msra.mxu0 0.0
    %82 = vmatprep.subr.mxu0 0.0
    %83 = vmatpush1.msra.mxu0 0.0
    %84 = vmatprep.subr.mxu0 0.0
    %85 = vmatpush1.msra.mxu0 0.0
    %86 = vmatprep.subr.mxu0 0.0
    %87 = vmatpush1.msra.mxu0 0.0
    %88 = vmatprep.subr.mxu0 0.0
    %89 = vmatpush1.msra.mxu0 0.0
    %90 = vmatprep.subr.mxu0 0.0
    %91 = vmatpush1.msra.mxu0 0.0
    %92 = vmatprep.subr.mxu0 0.0
    %93 = vmatpush1.msra.mxu0 0.0
    %94 = vmatprep.subr.mxu0 0.0
    %95 = vmatpush1.msra.mxu0 0.0
    %96 = vmatprep.subr.mxu0 0.0
    %97 = vmatpush1.msra.mxu0 0.0
    %98 = vmatprep.subr.mxu0 0.0
    %99 = vmatpush1.msra.mxu0 0.0
    %100 = vmatprep.subr.mxu0 0.0
    %101 = vmatpush1.msra.mxu0 0.0
    %102 = vmatprep.subr.mxu0 0.0
    %103 = vmatpush1.msra.mxu0 0.0
    %104 = vmatprep.subr.mxu0 0.0
    %105 = vmatpush1.msra.mxu0 0.0
    %106 = vmatprep.subr.mxu0 0.0
    %107 = vmatpush1.msra.mxu0 0.0
    %108 = vmatprep.subr.mxu0 0.0
    %109 = vmatpush1.msra.mxu0 0.0
    %110 = vmatprep.subr.mxu0 0.0
    %111 = vmatpush1.msra.mxu0 0.0
    %112 = vmatprep.subr.mxu0 0.0
    %113 = vmatpush1.msra.mxu0 0.0
    %114 = vmatprep.subr.mxu0 0.0
    %115 = vmatpush1.msra.mxu0 0.0
    %116 = vmatprep.subr.mxu0 0.0
    %117 = vmatpush1.msra.mxu0 0.0
    %118 = vmatprep.subr.mxu0 0.0
    %119 = vmatpush1.msra.mxu0 0.0
    %120 = vmatprep.subr.mxu0 0.0
    %121 = vmatpush1.msra.mxu0 0.0
    %122 = vmatprep.subr.mxu0 0.0
    %123 = vmatpush1.msra.mxu0 0.0
    %124 = vmatprep.subr.mxu0 0.0
    %125 = vmatpush1.msra.mxu0 0.0
    %126 = vmatprep.subr.mxu0 0.0
    %127 = vmatpush1.msra.mxu0 0.0
    %128 = vmatprep.subr.mxu0 0.0
    %129 = vmatpush1.msra.mxu0 0.0
    %130 = vmatprep.subr.mxu0 0.0
    %131 = vmatpush1.msra.mxu0 0.0
    %132 = vmatprep.subr.mxu0 0.0
    %133 = vmatpush1.msra.mxu0 0.0
    %134 = vmatprep.mubr.f32.mxu0 0.0
    %135 = vmatmul.mubr.f32.gmra.mrb[0].mxu0 %v68
    %v136 = vpop.f32.mrb[0].mxu0
    %v137 = vadd.f32 %v64, %v136
    %v138 = vpop.f32.mrb[0].mxu0
    %139 = vdwg.mxu0
    %vm140 = vcmp.ge.f32.partialorder %v137, 0.0
    %v141 = vmul.f32 %v137, 0.2
    %v142 = vsel %vm140, %v137, %v141
    %v143 = vld [vmem:[%s3] sm:$0xff]
    %v144 = vld [vmem:[%s3 + $0x8] sm:$0xff]
    %v145 = vld [vmem:[%s3 + $0x10] sm:$0xff]
    %v146 = vld [vmem:[%s3 + $0x18] sm:$0xff]
    %v147 = vld [vmem:[%s3 + $0x20] sm:$0xff]
    %v148 = vld [vmem:[%s3 + $0x28] sm:$0xff]
    %v149 = vld [vmem:[%s3 + $0x30] sm:$0xff]
    %v150 = vld [vmem:[%s3 + $0x38] sm:$0xff]
    %v151 = vld [vmem:[%s4] sm:$0x1]
    %v153 = vlaneseq
    %v154 = vshrl.u32 %v153, 7
    %v155 = vsub.s32 0, %v154
    %v156 = vrot.slane %v151, %v155
    %vm158 = vcmask 523264
    %v160 = vsel %vm158, %v142, 0
    %162 = vmatprep.subr.mxu0 0.0
    %163 = vmatpush1.msra.mxu0 %v143
    %164 = vmatprep.subr.mxu0 0.0
    %165 = vmatpush1.msra.mxu0 %v144
    %166 = vmatprep.subr.mxu0 0.0
    %167 = vmatpush1.msra.mxu0 %v145
    %168 = vmatprep.subr.mxu0 0.0
    %169 = vmatpush1.msra.mxu0 %v146
    %170 = vmatprep.subr.mxu0 0.0
    %171 = vmatpush1.msra.mxu0 %v147
    %172 = vmatprep.subr.mxu0 0.0
    %173 = vmatpush1.msra.mxu0 %v148
    %174 = vmatprep.subr.mxu0 0.0
    %175 = vmatpush1.msra.mxu0 %v149
    %176 = vmatprep.subr.mxu0 0.0
    %177 = vmatpush1.msra.mxu0 %v150
    %178 = vmatprep.subr.mxu0 0.0
    %179 = vmatpush1.msra.mxu0 0.0
    %180 = vmatprep.subr.mxu0 0.0
    %181 = vmatpush1.msra.mxu0 0.0
    %182 = vmatprep.subr.mxu0 0.0
    %183 = vmatpush1.msra.mxu0 0.0
    %184 = vmatprep.subr.mxu0 0.0
    %185 = vmatpush1.msra.mxu0 0.0
    %186 = vmatprep.subr.mxu0 0.0
    %187 = vmatpush1.msra.mxu0 0.0
    %188 = vmatprep.subr.mxu0 0.0
    %189 = vmatpush1.msra.mxu0 0.0
    %190 = vmatprep.subr.mxu0 0.0
    %191 = vmatpush1.msra.mxu0 0.0
    %192 = vmatprep.subr.mxu0 0.0
    %193 = vmatpush1.msra.mxu0 0.0
    %194 = vmatprep.subr.mxu0 0.0
    %195 = vmatpush1.msra.mxu0 0.0
    %196 = vmatprep.subr.mxu0 0.0
    %197 = vmatpush1.msra.mxu0 0.0
    %198 = vmatprep.subr.mxu0 0.0
    %199 = vmatpush1.msra.mxu0 0.0
    %200 = vmatprep.subr.mxu0 0.0
    %201 = vmatpush1.msra.mxu0 0.0
    %202 = vmatprep.subr.mxu0 0.0
    %203 = vmatpush1.msra.mxu0 0.0
    %204 = vmatprep.subr.mxu0 0.0
    %205 = vmatpush1.msra.mxu0 0.0
    %206 = vmatprep.subr.mxu0 0.0
    %207 = vmatpush1.msra.mxu0 0.0
    %208 = vmatprep.subr.mxu0 0.0
    %209 = vmatpush1.msra.mxu0 0.0
    %210 = vmatprep.subr.mxu0 0.0
    %211 = vmatpush1.msra.mxu0 0.0
    %212 = vmatprep.subr.mxu0 0.0
    %213 = vmatpush1.msra.mxu0 0.0
    %214 = vmatprep.subr.mxu0 0.0
    %215 = vmatpush1.msra.mxu0 0.0
    %216 = vmatprep.subr.mxu0 0.0
    %217 = vmatpush1.msra.mxu0 0.0
    %218 = vmatprep.subr.mxu0 0.0
    %219 = vmatpush1.msra.mxu0 0.0
    %220 = vmatprep.subr.mxu0 0.0
    %221 = vmatpush1.msra.mxu0 0.0
    %222 = vmatprep.subr.mxu0 0.0
    %223 = vmatpush1.msra.mxu0 0.0
    %224 = vmatprep.subr.mxu0 0.0
    %225 = vmatpush1.msra.mxu0 0.0
    %226 = vmatprep.mubr.f32.mxu0 0.0
    %227 = vmatmul.mubr.f32.gmra.mrb[0].mxu0 %v160
    %v228 = vpop.f32.mrb[0].mxu0
    %v229 = vadd.f32 %v156, %v228
    %v230 = vpop.f32.mrb[0].mxu0
    %231 = vdwg.mxu0
    %vm232 = vcmp.ge.f32.partialorder %v229, 0.0
    %v233 = vmul.f32 %v229, 0.2
    %v234 = vsel %vm232, %v229, %v233
    %v235 = vld [vmem:[%s5] sm:$0xff]
    %v236 = vld [vmem:[%s5 + $0x8] sm:$0xff]
    %v237 = vld [vmem:[%s5 + $0x10] sm:$0xff]
    %v238 = vld [vmem:[%s5 + $0x18] sm:$0xff]
    %v239 = vld [vmem:[%s6] sm:$0x1]
    %v241 = vlaneseq
    %v242 = vshrl.u32 %v241, 7
    %v243 = vsub.s32 0, %v242
    %v244 = vrot.slane %v239, %v243
    %vm246 = vcmask 261120
    %v248 = vsel %vm246, %v234, 0
    %250 = vmatprep.subr.mxu0 0.0
    %251 = vmatpush1.msra.mxu0 %v235
    %252 = vmatprep.subr.mxu0 0.0
    %253 = vmatpush1.msra.mxu0 %v236
    %254 = vmatprep.subr.mxu0 0.0
    %255 = vmatpush1.msra.mxu0 %v237
    %256 = vmatprep.subr.mxu0 0.0
    %257 = vmatpush1.msra.mxu0 %v238
    %258 = vmatprep.subr.mxu0 0.0
    %259 = vmatpush1.msra.mxu0 0.0
    %260 = vmatprep.subr.mxu0 0.0
    %261 = vmatpush1.msra.mxu0 0.0
    %262 = vmatprep.subr.mxu0 0.0
    %263 = vmatpush1.msra.mxu0 0.0
    %264 = vmatprep.subr.mxu0 0.0
    %265 = vmatpush1.msra.mxu0 0.0
    %266 = vmatprep.subr.mxu0 0.0
    %267 = vmatpush1.msra.mxu0 0.0
    %268 = vmatprep.subr.mxu0 0.0
    %269 = vmatpush1.msra.mxu0 0.0
    %270 = vmatprep.subr.mxu0 0.0
    %271 = vmatpush1.msra.mxu0 0.0
    %272 = vmatprep.subr.mxu0 0.0
    %273 = vmatpush1.msra.mxu0 0.0
    %274 = vmatprep.subr.mxu0 0.0
    %275 = vmatpush1.msra.mxu0 0.0
    %276 = vmatprep.subr.mxu0 0.0
    %277 = vmatpush1.msra.mxu0 0.0
    %278 = vmatprep.subr.mxu0 0.0
    %279 = vmatpush1.msra.mxu0 0.0
    %280 = vmatprep.subr.mxu0 0.0
    %281 = vmatpush1.msra.mxu0 0.0
    %282 = vmatprep.subr.mxu0 0.0
    %283 = vmatpush1.msra.mxu0 0.0
    %284 = vmatprep.subr.mxu0 0.0
    %285 = vmatpush1.msra.mxu0 0.0
    %286 = vmatprep.subr.mxu0 0.0
    %287 = vmatpush1.msra.mxu0 0.0
    %288 = vmatprep.subr.mxu0 0.0
    %289 = vmatpush1.msra.mxu0 0.0
    %290 = vmatprep.subr.mxu0 0.0
    %291 = vmatpush1.msra.mxu0 0.0
    %292 = vmatprep.subr.mxu0 0.0
    %293 = vmatpush1.msra.mxu0 0.0
    %294 = vmatprep.subr.mxu0 0.0
    %295 = vmatpush1.msra.mxu0 0.0
    %296 = vmatprep.subr.mxu0 0.0
    %297 = vmatpush1.msra.mxu0 0.0
    %298 = vmatprep.subr.mxu0 0.0
    %299 = vmatpush1.msra.mxu0 0.0
    %300 = vmatprep.subr.mxu0 0.0
    %301 = vmatpush1.msra.mxu0 0.0
    %302 = vmatprep.subr.mxu0 0.0
    %303 = vmatpush1.msra.mxu0 0.0
    %304 = vmatprep.subr.mxu0 0.0
    %305 = vmatpush1.msra.mxu0 0.0
    %306 = vmatprep.subr.mxu0 0.0
    %307 = vmatpush1.msra.mxu0 0.0
    %308 = vmatprep.subr.mxu0 0.0
    %309 = vmatpush1.msra.mxu0 0.0
    %310 = vmatprep.subr.mxu0 0.0
    %311 = vmatpush1.msra.mxu0 0.0
    %312 = vmatprep.subr.mxu0 0.0
    %313 = vmatpush1.msra.mxu0 0.0
    %314 = vmatprep.mubr.f32.mxu0 0.0
    %315 = vmatmul.mubr.f32.gmra.mrb[0].mxu0 %v248
    %v316 = vpop.f32.mrb[0].mxu0
    %v317 = vadd.f32 %v244, %v316
    %v318 = vpop.f32.mrb[0].mxu0
    %319 = vdwg.mxu0
    %v320 = vld [vmem:[%s7] sm:$0xff]
    %v321 = vld [vmem:[%s7 + $0x8] sm:$0xff]
    %v322 = vld [vmem:[%s7 + $0x10] sm:$0xff]
    %v323 = vld [vmem:[%s7 + $0x18] sm:$0xff]
    %v324 = vld [vmem:[%s7 + $0x20] sm:$0xff]
    %v325 = vld [vmem:[%s7 + $0x28] sm:$0xff]
    %v326 = vld [vmem:[%s7 + $0x30] sm:$0xff]
    %v327 = vld [vmem:[%s7 + $0x38] sm:$0xff]
    %v328 = vld [vmem:[%s7 + $0x40] sm:$0xff]
    %v329 = vld [vmem:[%s7 + $0x48] sm:$0xff]
    %v330 = vld [vmem:[%s7 + $0x50] sm:$0xff]
    %v331 = vld [vmem:[%s7 + $0x58] sm:$0xff]
    %v332 = vld [vmem:[%s7 + $0x60] sm:$0xff]
    %v333 = vld [vmem:[%s7 + $0x68] sm:$0xff]
    %v334 = vld [vmem:[%s7 + $0x70] sm:$0xff]
    %v335 = vld [vmem:[%s7 + $0x78] sm:$0xff]
    %v337 = vsel %vm246, %v317, 0
    %v340 = vsel %vm246, %v320, 0
    %v343 = vsel %vm246, %v321, 0
    %v346 = vsel %vm246, %v322, 0
    %v349 = vsel %vm246, %v323, 0
    %v352 = vsel %vm246, %v324, 0
    %v355 = vsel %vm246, %v325, 0
    %v358 = vsel %vm246, %v326, 0
    %v361 = vsel %vm246, %v327, 0
    %v364 = vsel %vm246, %v328, 0
    %v367 = vsel %vm246, %v329, 0
    %v370 = vsel %vm246, %v330, 0
    %v373 = vsel %vm246, %v331, 0
    %v376 = vsel %vm246, %v332, 0
    %v379 = vsel %vm246, %v333, 0
    %v382 = vsel %vm246, %v334, 0
    %v385 = vsel %vm246, %v335, 0
    %387 = vmatprep.subr.mxu0 0.0
    %388 = vmatpush1.xpose.msra.mxu0 %v340
    %389 = vmatprep.subr.mxu0 0.0
    %390 = vmatpush1.xpose.msra.mxu0 %v343
    %391 = vmatprep.subr.mxu0 0.0
    %392 = vmatpush1.xpose.msra.mxu0 %v346
    %393 = vmatprep.subr.mxu0 0.0
    %394 = vmatpush1.xpose.msra.mxu0 %v349
    %395 = vmatprep.subr.mxu0 0.0
    %396 = vmatpush1.xpose.msra.mxu0 %v352
    %397 = vmatprep.subr.mxu0 0.0
    %398 = vmatpush1.xpose.msra.mxu0 %v355
    %399 = vmatprep.subr.mxu0 0.0
    %400 = vmatpush1.xpose.msra.mxu0 %v358
    %401 = vmatprep.subr.mxu0 0.0
    %402 = vmatpush1.xpose.msra.mxu0 %v361
    %403 = vmatprep.subr.mxu0 0.0
    %404 = vmatpush1.xpose.msra.mxu0 %v364
    %405 = vmatprep.subr.mxu0 0.0
    %406 = vmatpush1.xpose.msra.mxu0 %v367
    %407 = vmatprep.subr.mxu0 0.0
    %408 = vmatpush1.xpose.msra.mxu0 %v370
    %409 = vmatprep.subr.mxu0 0.0
    %410 = vmatpush1.xpose.msra.mxu0 %v373
    %411 = vmatprep.subr.mxu0 0.0
    %412 = vmatpush1.xpose.msra.mxu0 %v376
    %413 = vmatprep.subr.mxu0 0.0
    %414 = vmatpush1.xpose.msra.mxu0 %v379
    %415 = vmatprep.subr.mxu0 0.0
    %416 = vmatpush1.xpose.msra.mxu0 %v382
    %417 = vmatprep.subr.mxu0 0.0
    %418 = vmatpush1.xpose.msra.mxu0 %v385
    %419 = vmatprep.subr.mxu0 0.0
    %420 = vmatpush1.xpose.msra.mxu0 0.0
    %421 = vmatprep.subr.mxu0 0.0
    %422 = vmatpush1.xpose.msra.mxu0 0.0
    %423 = vmatprep.subr.mxu0 0.0
    %424 = vmatpush1.xpose.msra.mxu0 0.0
    %425 = vmatprep.subr.mxu0 0.0
    %426 = vmatpush1.xpose.msra.mxu0 0.0
    %427 = vmatprep.subr.mxu0 0.0
    %428 = vmatpush1.xpose.msra.mxu0 0.0
    %429 = vmatprep.subr.mxu0 0.0
    %430 = vmatpush1.xpose.msra.mxu0 0.0
    %431 = vmatprep.subr.mxu0 0.0
    %432 = vmatpush1.xpose.msra.mxu0 0.0
    %433 = vmatprep.subr.mxu0 0.0
    %434 = vmatpush1.xpose.msra.mxu0 0.0
    %435 = vmatprep.subr.mxu0 0.0
    %436 = vmatpush1.xpose.msra.mxu0 0.0
    %437 = vmatprep.subr.mxu0 0.0
    %438 = vmatpush1.xpose.msra.mxu0 0.0
    %439 = vmatprep.subr.mxu0 0.0
    %440 = vmatpush1.xpose.msra.mxu0 0.0
    %441 = vmatprep.subr.mxu0 0.0
    %442 = vmatpush1.xpose.msra.mxu0 0.0
    %443 = vmatprep.subr.mxu0 0.0
    %444 = vmatpush1.xpose.msra.mxu0 0.0
    %445 = vmatprep.subr.mxu0 0.0
    %446 = vmatpush1.xpose.msra.mxu0 0.0
    %447 = vmatprep.subr.mxu0 0.0
    %448 = vmatpush1.xpose.msra.mxu0 0.0
    %449 = vmatprep.subr.mxu0 0.0
    %450 = vmatpush1.xpose.msra.mxu0 0.0
    %451 = vmatprep.mubr.f32.mxu0 0.0
    %452 = vmatmul.mubr.f32.gmra.mrb[0].mxu0 %v337
    %v453 = vpop.f32.mrb[0].mxu0
    %v454 = vadd.f32 0.0, %v453
    %v455 = vpop.f32.mrb[0].mxu0
    %456 = vdwg.mxu0
    %v457 = vmul.f32 %v317, %v317
    %v458 = vsel %vm246, %v457, 0.0
    %459 = vadd.xlane.f32.xlu0 %v458
    %v460 = vpop.xlane.xlu0 %459
    %v461 = vld [vmem:[%s8] sm:$0x1]
    %v463 = vlaneseq
    %v464 = vshrl.u32 %v463, 7
    %v465 = vsub.s32 0, %v464
    %v466 = vrot.slane %v461, %v465
    %v468 = vadd.f32 %v460, %v466
    %v469 = vmul.f32 %v454, 2.0
    %v470 = vsub.f32 %v468, %v469
    %471 = vmin.xlane.f32.xlu0 %v470
    %v472 = vpop.xlane.xlu0 %471
    %v473 = vlaneseq
    %v474 = vand.u32 %v473, 127
    %vm475 = vcmp.le.f32.partialorder %v470, %v472
    %v476 = vsel %vm475, %v474, 128
    %v477 = vand.u32 %v476, 65535
    %v478 = vshra.s32 %v476, 16
    %v479 = vcvt.s32.f32 %v477
    %v480 = vcvt.s32.f32 %v478
    %481 = vmin.xlane.f32.xlu0 %v480
    %v482 = vpop.xlane.xlu0 %481
    %vm483 = vcmp.eq.f32.partialorder %v480, %v482
    %v484 = vsel %vm483, %v479, inf
    %485 = vmin.xlane.f32.xlu0 %v484
    %v486 = vpop.xlane.xlu0 %485
    %v487 = vcvt.f32.s32 %v486
    %v488 = vcvt.f32.s32 %v482
    %v489 = vshll.u32 %v488, 16
    %v490 = vadd.s32 %v489, %v487
    %vm491 = vcmp.eq.s32.totalorder %v474, %v490
    %v492 = vsel %vm491, 1, 0
    %v493 = vcvt.s32.f32 %v492
    %494 = vmatprep.subr.mxu0 0.0
    %495 = vmatpush1.msra.mxu0 %v320
    %496 = vmatprep.subr.mxu0 0.0
    %497 = vmatpush1.msra.mxu0 %v321
    %498 = vmatprep.subr.mxu0 0.0
    %499 = vmatpush1.msra.mxu0 %v322
    %500 = vmatprep.subr.mxu0 0.0
    %501 = vmatpush1.msra.mxu0 %v323
    %502 = vmatprep.subr.mxu0 0.0
    %503 = vmatpush1.msra.mxu0 %v324
    %504 = vmatprep.subr.mxu0 0.0
    %505 = vmatpush1.msra.mxu0 %v325
    %506 = vmatprep.subr.mxu0 0.0
    %507 = vmatpush1.msra.mxu0 %v326
    %508 = vmatprep.subr.mxu0 0.0
    %509 = vmatpush1.msra.mxu0 %v327
    %510 = vmatprep.subr.mxu0 0.0
    %511 = vmatpush1.msra.mxu0 %v328
    %512 = vmatprep.subr.mxu0 0.0
    %513 = vmatpush1.msra.mxu0 %v329
    %514 = vmatprep.subr.mxu0 0.0
    %515 = vmatpush1.msra.mxu0 %v330
    %516 = vmatprep.subr.mxu0 0.0
    %517 = vmatpush1.msra.mxu0 %v331
    %518 = vmatprep.subr.mxu0 0.0
    %519 = vmatpush1.msra.mxu0 %v332
    %520 = vmatprep.subr.mxu0 0.0
    %521 = vmatpush1.msra.mxu0 %v333
    %522 = vmatprep.subr.mxu0 0.0
    %523 = vmatpush1.msra.mxu0 %v334
    %524 = vmatprep.subr.mxu0 0.0
    %525 = vmatpush1.msra.mxu0 %v335
    %526 = vmatprep.subr.mxu0 0.0
    %527 = vmatpush1.msra.mxu0 0.0
    %528 = vmatprep.subr.mxu0 0.0
    %529 = vmatpush1.msra.mxu0 0.0
    %530 = vmatprep.subr.mxu0 0.0
    %531 = vmatpush1.msra.mxu0 0.0
    %532 = vmatprep.subr.mxu0 0.0
    %533 = vmatpush1.msra.mxu0 0.0
    %534 = vmatprep.subr.mxu0 0.0
    %535 = vmatpush1.msra.mxu0 0.0
    %536 = vmatprep.subr.mxu0 0.0
    %537 = vmatpush1.msra.mxu0 0.0
    %538 = vmatprep.subr.mxu0 0.0
    %539 = vmatpush1.msra.mxu0 0.0
    %540 = vmatprep.subr.mxu0 0.0
    %541 = vmatpush1.msra.mxu0 0.0
    %542 = vmatprep.subr.mxu0 0.0
    %543 = vmatpush1.msra.mxu0 0.0
    %544 = vmatprep.subr.mxu0 0.0
    %545 = vmatpush1.msra.mxu0 0.0
    %546 = vmatprep.subr.mxu0 0.0
    %547 = vmatpush1.msra.mxu0 0.0
    %548 = vmatprep.subr.mxu0 0.0
    %549 = vmatpush1.msra.mxu0 0.0
    %550 = vmatprep.subr.mxu0 0.0
    %551 = vmatpush1.msra.mxu0 0.0
    %552 = vmatprep.subr.mxu0 0.0
    %553 = vmatpush1.msra.mxu0 0.0
    %554 = vmatprep.subr.mxu0 0.0
    %555 = vmatpush1.msra.mxu0 0.0
    %556 = vmatprep.subr.mxu0 0.0
    %557 = vmatpush1.msra.mxu0 0.0
    %558 = vmatprep.mubr.f32.mxu0 0.0
    %559 = vmatmul.mubr.f32.gmra.mrb[0].mxu0 %v493
    %v560 = vpop.f32.mrb[0].mxu0
    %v561 = vadd.f32 0.0, %v560
    %v562 = vpop.f32.mrb[0].mxu0
    %563 = vdwg.mxu0
    %564 = vst.msk [vmem:[#allocation4] sm:$0xff] %vm246, %v561
    %565 = vst [vmem:[%s17] sm:$0xff] %v490
    %v566 = vsub.f32 %v561, %v317
    %v567 = vmul.f32 %v566, %v566
    %v568 = vsel %vm246, %v567, 0.0
    %569 = vadd.xlane.f32.xlu0 %v568
    %v570 = vpop.xlane.xlu0 %569
    %v571 = vrot.slane %v570, 4
    %v572 = vadd.f32 %v570, %v571
    %v573 = vrot.slane %v572, 2
    %v574 = vadd.f32 %v572, %v573
    %v575 = vrot.slane %v574, 1
    %v576 = vadd.f32 %v574, %v575
    %s577 = vtos %v576
    %v578 = vstv %s577
    %v579 = vmul.f32 %v578, 1.25
    %v580 = vrcp.pop 256.0
    %v581 = vmul.f32 %v579, %v580
    %v582 = vrot.slane %v493, 4
    %v583 = vadd.f32 %v493, %v582
    %v584 = vrot.slane %v583, 2
    %v585 = vadd.f32 %v583, %v584
    %v586 = vrot.slane %v585, 1
    %v587 = vadd.f32 %v585, %v586
    %v588 = vmul.f32 %v587, 0.125
    %v589 = vadd.f32 %v588, 1e-10
    %v590 = vlog2.pop %v589
    %v591 = vmul.f32 %v590, 0.6931472
    %v592 = vmul.f32 %v588, %v591
    %593 = vadd.xlane.f32.xlu0 %v592
    %v594 = vpop.xlane.xlu0 %593
    %v595 = vsub.f32 0.0, %v594
    %v596 = vmul.f32 %v595, 1.442695
    %v597 = vpow.pop %v596
    %v598 = vld [vmem:[%s9] sm:$0xff]
    %v599 = vld [vmem:[%s9 + $0x8] sm:$0xff]
    %v600 = vld [vmem:[%s9 + $0x10] sm:$0xff]
    %v601 = vld [vmem:[%s9 + $0x18] sm:$0xff]
    %v602 = vld [vmem:[%s10] sm:$0x1]
    %v604 = vlaneseq
    %v605 = vshrl.u32 %v604, 7
    %v606 = vsub.s32 0, %v605
    %v607 = vrot.slane %v602, %v606
    %v610 = vsel %vm246, %v561, 0
    %612 = vmatprep.subr.mxu0 0.0
    %613 = vmatpush1.msra.mxu0 %v598
    %614 = vmatprep.subr.mxu0 0.0
    %615 = vmatpush1.msra.mxu0 %v599
    %616 = vmatprep.subr.mxu0 0.0
    %617 = vmatpush1.msra.mxu0 %v600
    %618 = vmatprep.subr.mxu0 0.0
    %619 = vmatpush1.msra.mxu0 %v601
    %620 = vmatprep.subr.mxu0 0.0
    %621 = vmatpush1.msra.mxu0 0.0
    %622 = vmatprep.subr.mxu0 0.0
    %623 = vmatpush1.msra.mxu0 0.0
    %624 = vmatprep.subr.mxu0 0.0
    %625 = vmatpush1.msra.mxu0 0.0
    %626 = vmatprep.subr.mxu0 0.0
    %627 = vmatpush1.msra.mxu0 0.0
    %628 = vmatprep.subr.mxu0 0.0
    %629 = vmatpush1.msra.mxu0 0.0
    %630 = vmatprep.subr.mxu0 0.0
    %631 = vmatpush1.msra.mxu0 0.0
    %632 = vmatprep.subr.mxu0 0.0
    %633 = vmatpush1.msra.mxu0 0.0
    %634 = vmatprep.subr.mxu0 0.0
    %635 = vmatpush1.msra.mxu0 0.0
    %636 = vmatprep.subr.mxu0 0.0
    %637 = vmatpush1.msra.mxu0 0.0
    %638 = vmatprep.subr.mxu0 0.0
    %639 = vmatpush1.msra.mxu0 0.0
    %640 = vmatprep.subr.mxu0 0.0
    %641 = vmatpush1.msra.mxu0 0.0
    %642 = vmatprep.subr.mxu0 0.0
    %643 = vmatpush1.msra.mxu0 0.0
    %644 = vmatprep.subr.mxu0 0.0
    %645 = vmatpush1.msra.mxu0 0.0
    %646 = vmatprep.subr.mxu0 0.0
    %647 = vmatpush1.msra.mxu0 0.0
    %648 = vmatprep.subr.mxu0 0.0
    %649 = vmatpush1.msra.mxu0 0.0
    %650 = vmatprep.subr.mxu0 0.0
    %651 = vmatpush1.msra.mxu0 0.0
    %652 = vmatprep.subr.mxu0 0.0
    %653 = vmatpush1.msra.mxu0 0.0
    %654 = vmatprep.subr.mxu0 0.0
    %655 = vmatpush1.msra.mxu0 0.0
    %656 = vmatprep.subr.mxu0 0.0
    %657 = vmatpush1.msra.mxu0 0.0
    %658 = vmatprep.subr.mxu0 0.0
    %659 = vmatpush1.msra.mxu0 0.0
    %660 = vmatprep.subr.mxu0 0.0
    %661 = vmatpush1.msra.mxu0 0.0
    %662 = vmatprep.subr.mxu0 0.0
    %663 = vmatpush1.msra.mxu0 0.0
    %664 = vmatprep.subr.mxu0 0.0
    %665 = vmatpush1.msra.mxu0 0.0
    %666 = vmatprep.subr.mxu0 0.0
    %667 = vmatpush1.msra.mxu0 0.0
    %668 = vmatprep.subr.mxu0 0.0
    %669 = vmatpush1.msra.mxu0 0.0
    %670 = vmatprep.subr.mxu0 0.0
    %671 = vmatpush1.msra.mxu0 0.0
    %672 = vmatprep.subr.mxu0 0.0
    %673 = vmatpush1.msra.mxu0 0.0
    %674 = vmatprep.subr.mxu0 0.0
    %675 = vmatpush1.msra.mxu0 0.0
    %676 = vmatprep.mubr.f32.mxu0 0.0
    %677 = vmatmul.mubr.f32.gmra.mrb[0].mxu0 %v610
    %v678 = vpop.f32.mrb[0].mxu0
    %v679 = vadd.f32 %v607, %v678
    %v680 = vpop.f32.mrb[0].mxu0
    %681 = vdwg.mxu0
    %vm682 = vcmp.ge.f32.partialorder %v679, 0.0
    %v683 = vmul.f32 %v679, 0.2
    %v684 = vsel %vm682, %v679, %v683
    %v685 = vld [vmem:[%s11] sm:$0xff]
    %v686 = vld [vmem:[%s11 + $0x8] sm:$0xff]
    %v687 = vld [vmem:[%s11 + $0x10] sm:$0xff]
    %v688 = vld [vmem:[%s11 + $0x18] sm:$0xff]
    %v689 = vld [vmem:[%s12] sm:$0x1]
    %v691 = vlaneseq
    %v692 = vshrl.u32 %v691, 7
    %v693 = vsub.s32 0, %v692
    %v694 = vrot.slane %v689, %v693
    %v697 = vsel %vm246, %v684, 0
    %699 = vmatprep.subr.mxu0 0.0
    %700 = vmatpush1.msra.mxu0 %v685
    %701 = vmatprep.subr.mxu0 0.0
    %702 = vmatpush1.msra.mxu0 %v686
    %703 = vmatprep.subr.mxu0 0.0
    %704 = vmatpush1.msra.mxu0 %v687
    %705 = vmatprep.subr.mxu0 0.0
    %706 = vmatpush1.msra.mxu0 %v688
    %707 = vmatprep.subr.mxu0 0.0
    %708 = vmatpush1.msra.mxu0 0.0
    %709 = vmatprep.subr.mxu0 0.0
    %710 = vmatpush1.msra.mxu0 0.0
    %711 = vmatprep.subr.mxu0 0.0
    %712 = vmatpush1.msra.mxu0 0.0
    %713 = vmatprep.subr.mxu0 0.0
    %714 = vmatpush1.msra.mxu0 0.0
    %715 = vmatprep.subr.mxu0 0.0
    %716 = vmatpush1.msra.mxu0 0.0
    %717 = vmatprep.subr.mxu0 0.0
    %718 = vmatpush1.msra.mxu0 0.0
    %719 = vmatprep.subr.mxu0 0.0
    %720 = vmatpush1.msra.mxu0 0.0
    %721 = vmatprep.subr.mxu0 0.0
    %722 = vmatpush1.msra.mxu0 0.0
    %723 = vmatprep.subr.mxu0 0.0
    %724 = vmatpush1.msra.mxu0 0.0
    %725 = vmatprep.subr.mxu0 0.0
    %726 = vmatpush1.msra.mxu0 0.0
    %727 = vmatprep.subr.mxu0 0.0
    %728 = vmatpush1.msra.mxu0 0.0
    %729 = vmatprep.subr.mxu0 0.0
    %730 = vmatpush1.msra.mxu0 0.0
    %731 = vmatprep.subr.mxu0 0.0
    %732 = vmatpush1.msra.mxu0 0.0
    %733 = vmatprep.subr.mxu0 0.0
    %734 = vmatpush1.msra.mxu0 0.0
    %735 = vmatprep.subr.mxu0 0.0
    %736 = vmatpush1.msra.mxu0 0.0
    %737 = vmatprep.subr.mxu0 0.0
    %738 = vmatpush1.msra.mxu0 0.0
    %739 = vmatprep.subr.mxu0 0.0
    %740 = vmatpush1.msra.mxu0 0.0
    %741 = vmatprep.subr.mxu0 0.0
    %742 = vmatpush1.msra.mxu0 0.0
    %743 = vmatprep.subr.mxu0 0.0
    %744 = vmatpush1.msra.mxu0 0.0
    %745 = vmatprep.subr.mxu0 0.0
    %746 = vmatpush1.msra.mxu0 0.0
    %747 = vmatprep.subr.mxu0 0.0
    %748 = vmatpush1.msra.mxu0 0.0
    %749 = vmatprep.subr.mxu0 0.0
    %750 = vmatpush1.msra.mxu0 0.0
    %751 = vmatprep.subr.mxu0 0.0
    %752 = vmatpush1.msra.mxu0 0.0
    %753 = vmatprep.subr.mxu0 0.0
    %754 = vmatpush1.msra.mxu0 0.0
    %755 = vmatprep.subr.mxu0 0.0
    %756 = vmatpush1.msra.mxu0 0.0
    %757 = vmatprep.subr.mxu0 0.0
    %758 = vmatpush1.msra.mxu0 0.0
    %759 = vmatprep.subr.mxu0 0.0
    %760 = vmatpush1.msra.mxu0 0.0
    %761 = vmatprep.subr.mxu0 0.0
    %762 = vmatpush1.msra.mxu0 0.0
    %763 = vmatprep.mubr.f32.mxu0 0.0
    %764 = vmatmul.mubr.f32.gmra.mrb[0].mxu0 %v697
    %v765 = vpop.f32.mrb[0].mxu0
    %v766 = vadd.f32 %v694, %v765
    %v767 = vpop.f32.mrb[0].mxu0
    %768 = vdwg.mxu0
    %vm769 = vcmp.ge.f32.partialorder %v766, 0.0
    %v770 = vmul.f32 %v766, 0.2
    %v771 = vsel %vm769, %v766, %v770
    %v772 = vld [vmem:[%s13] sm:$0xff]
    %v773 = vld [vmem:[%s13 + $0x8] sm:$0xff]
    %v774 = vld [vmem:[%s13 + $0x10] sm:$0xff]
    %v775 = vld [vmem:[%s13 + $0x18] sm:$0xff]
    %v776 = vld [vmem:[%s13 + $0x20] sm:$0xff]
    %v777 = vld [vmem:[%s13 + $0x28] sm:$0xff]
    %v778 = vld [vmem:[%s13 + $0x30] sm:$0xff]
    %v779 = vld [vmem:[%s13 + $0x38] sm:$0xff]
    %v780 = vld [vmem:[%s14] sm:$0x1]
    %v782 = vlaneseq
    %v783 = vshrl.u32 %v782, 7
    %v784 = vsub.s32 0, %v783
    %v785 = vrot.slane %v780, %v784
    %v788 = vsel %vm158, %v771, 0
    %790 = vmatprep.subr.mxu0 0.0
    %791 = vmatpush1.msra.mxu0 %v772
    %792 = vmatprep.subr.mxu0 0.0
    %793 = vmatpush1.msra.mxu0 %v773
    %794 = vmatprep.subr.mxu0 0.0
    %795 = vmatpush1.msra.mxu0 %v774
    %796 = vmatprep.subr.mxu0 0.0
    %797 = vmatpush1.msra.mxu0 %v775
    %798 = vmatprep.subr.mxu0 0.0
    %799 = vmatpush1.msra.mxu0 %v776
    %800 = vmatprep.subr.mxu0 0.0
    %801 = vmatpush1.msra.mxu0 %v777
    %802 = vmatprep.subr.mxu0 0.0
    %803 = vmatpush1.msra.mxu0 %v778
    %804 = vmatprep.subr.mxu0 0.0
    %805 = vmatpush1.msra.mxu0 %v779
    %806 = vmatprep.subr.mxu0 0.0
    %807 = vmatpush1.msra.mxu0 0.0
    %808 = vmatprep.subr.mxu0 0.0
    %809 = vmatpush1.msra.mxu0 0.0
    %810 = vmatprep.subr.mxu0 0.0
    %811 = vmatpush1.msra.mxu0 0.0
    %812 = vmatprep.subr.mxu0 0.0
    %813 = vmatpush1.msra.mxu0 0.0
    %814 = vmatprep.subr.mxu0 0.0
    %815 = vmatpush1.msra.mxu0 0.0
    %816 = vmatprep.subr.mxu0 0.0
    %817 = vmatpush1.msra.mxu0 0.0
    %818 = vmatprep.subr.mxu0 0.0
    %819 = vmatpush1.msra.mxu0 0.0
    %820 = vmatprep.subr.mxu0 0.0
    %821 = vmatpush1.msra.mxu0 0.0
    %822 = vmatprep.subr.mxu0 0.0
    %823 = vmatpush1.msra.mxu0 0.0
    %824 = vmatprep.subr.mxu0 0.0
    %825 = vmatpush1.msra.mxu0 0.0
    %826 = vmatprep.subr.mxu0 0.0
    %827 = vmatpush1.msra.mxu0 0.0
    %828 = vmatprep.subr.mxu0 0.0
    %829 = vmatpush1.msra.mxu0 0.0
    %830 = vmatprep.subr.mxu0 0.0
    %831 = vmatpush1.msra.mxu0 0.0
    %832 = vmatprep.subr.mxu0 0.0
    %833 = vmatpush1.msra.mxu0 0.0
    %834 = vmatprep.subr.mxu0 0.0
    %835 = vmatpush1.msra.mxu0 0.0
    %836 = vmatprep.subr.mxu0 0.0
    %837 = vmatpush1.msra.mxu0 0.0
    %838 = vmatprep.subr.mxu0 0.0
    %839 = vmatpush1.msra.mxu0 0.0
    %840 = vmatprep.subr.mxu0 0.0
    %841 = vmatpush1.msra.mxu0 0.0
    %842 = vmatprep.subr.mxu0 0.0
    %843 = vmatpush1.msra.mxu0 0.0
    %844 = vmatprep.subr.mxu0 0.0
    %845 = vmatpush1.msra.mxu0 0.0
    %846 = vmatprep.subr.mxu0 0.0
    %847 = vmatpush1.msra.mxu0 0.0
    %848 = vmatprep.subr.mxu0 0.0
    %849 = vmatpush1.msra.mxu0 0.0
    %850 = vmatprep.subr.mxu0 0.0
    %851 = vmatpush1.msra.mxu0 0.0
    %852 = vmatprep.subr.mxu0 0.0
    %853 = vmatpush1.msra.mxu0 0.0
    %854 = vmatprep.mubr.f32.mxu0 0.0
    %855 = vmatmul.mubr.f32.gmra.mrb[0].mxu0 %v788
    %v856 = vpop.f32.mrb[0].mxu0
    %v857 = vadd.f32 %v785, %v856
    %v858 = vpop.f32.mrb[0].mxu0
    %859 = vdwg.mxu0
    %860 = vst.msk [vmem:[#allocation2] sm:$0xff] %vm66, %v857
    %v861 = vsub.f32 %v857, %v56
    %v862 = vmul.f32 %v861, %v861
    %v863 = vsel %vm66, %v862, 0.0
    %864 = vadd.xlane.f32.xlu0 %v863
    %v865 = vpop.xlane.xlu0 %864
    %v866 = vrot.slane %v865, 4
    %v867 = vadd.f32 %v865, %v866
    %v868 = vrot.slane %v867, 2
    %v869 = vadd.f32 %v867, %v868
    %v870 = vrot.slane %v869, 1
    %v871 = vadd.f32 %v869, %v870
    %s872 = vtos %v871
    %v873 = vstv %s872
    %v874 = vrcp.pop 128.0
    %v875 = vmul.f32 %v873, %v874
    %v876 = vadd.f32 %v875, %v581
    %vm877 = vcmp.eq.s32.totalorder %v474, 0
    %vm878 = vcmp.eq.s32.totalorder %v474, 1
    %vm879 = vcmp.eq.s32.totalorder %v474, 2
    %vm880 = vcmp.eq.s32.totalorder %v474, 3
    %v881 = vsel %vm880, %v876, 0.0
    %v882 = vsel %vm879, %v597, %v881
    %v883 = vsel %vm878, %v875, %v882
    %v884 = vsel %vm877, %v581, %v883
    %885 = vst [vmem:[%s18] sm:$0x1] %v884
    // Predicated region
    $region62: #{vqvae_forward.1} parent=1 // pred_check
      _
    $region63: #{vqvae_forward.1} parent=1 // pred_check_branch
      %887 = sbr.rel (0) target = $region65
    $region64: #{vqvae_forward.1} parent=1 // pred_region
      %s889 = ssub.s32 128, 128
      %890 = vsyncadd [#allocation3], %s889
      %s892 = sshll.u32 [#allocation2], 4
      %s893 = int_to_ptr.vmem [resolvable:$true] %s892
      %895 = dma.vmem_to_hbm [thread:$0]  %s893, 128, %s15, [#allocation3]
    $region65: #{vqvae_forward.1} parent=1 // pred_fallthru
      _
    // Predicated region
    $region66: #{vqvae_forward.1} parent=1 // pred_check
      _
    $region67: #{vqvae_forward.1} parent=1 // pred_check_branch
      %897 = sbr.rel (0) target = $region69
    $region68: #{vqvae_forward.1} parent=1 // pred_region
      %s899 = ssub.s32 128, 128
      %900 = vsyncadd [#allocation5], %s899
      %s902 = sshll.u32 [#allocation4], 4
      %s903 = int_to_ptr.vmem [resolvable:$true] %s902
      %905 = dma.vmem_to_hbm [thread:$0]  %s903, 128, %s16, [#allocation5]
    $region69: #{vqvae_forward.1} parent=1 // pred_fallthru
      _
    // Predicated region
    $region70: #{vqvae_forward.1} parent=1 // pred_check
      _
    $region71: #{vqvae_forward.1} parent=1 // pred_check_branch
      %907 = sbr.rel (0) target = $region73
    $region72: #{vqvae_forward.1} parent=1 // pred_region
      _
    $region73: #{vqvae_forward.1} parent=1 // pred_fallthru
      _
    // Predicated region
    $region74: #{vqvae_forward.1} parent=1 // pred_check
      _
    $region75: #{vqvae_forward.1} parent=1 // pred_check_branch
      %909 = sbr.rel (0) target = $region77
    $region76: #{vqvae_forward.1} parent=1 // pred_region
      _
    $region77: #{vqvae_forward.1} parent=1 // pred_fallthru
      _
    // Predicated region
    $region78: #{vqvae_forward.1} parent=1 // pred_check
      _
    $region79: #{vqvae_forward.1} parent=1 // pred_check_branch
      %911 = sbr.rel (0) target = $region81
    $region80: #{vqvae_forward.1} parent=1 // pred_region
      %912 = dma.done [#allocation3], 128
    $region81: #{vqvae_forward.1} parent=1 // pred_fallthru
      _
    // Predicated region
    $region82: #{vqvae_forward.1} parent=1 // pred_check
      _
    $region83: #{vqvae_forward.1} parent=1 // pred_check_branch
      %914 = sbr.rel (0) target = $region85
    $region84: #{vqvae_forward.1} parent=1 // pred_region
      %915 = dma.done [#allocation5], 128
    $region85: #{vqvae_forward.1} parent=1 // pred_fallthru
      _
    // Predicated region
    $region86: #{vqvae_forward.1} parent=1 // pred_check
      _
    $region87: #{vqvae_forward.1} parent=1 // pred_check_branch
      %917 = sbr.rel (0) target = $region89
    $region88: #{vqvae_forward.1} parent=1 // pred_region
      _
    $region89: #{vqvae_forward.1} parent=1 // pred_fallthru
      _
    // Predicated region
    $region90: #{vqvae_forward.1} parent=1 // pred_check
      _
    $region91: #{vqvae_forward.1} parent=1 // pred_check_branch
      %919 = sbr.rel (0) target = $region93
    $region92: #{vqvae_forward.1} parent=1 // pred_region
      _
    $region93: #{vqvae_forward.1} parent=1 // pred_fallthru
      _
    %920 = vsyncpa [#allocation3], 1
    %921 = vsyncpa [#allocation5], 1

</llo_original>
